<compile_context>
chip_gen: v6e
topology: v6e:2x2x1
jax: 0.10.0
libtpu: 0.0.40
codegen_flags: <defaults>
</compile_context>

<pallas_src>
import math
import functools

import jax
import jax.numpy as jnp
from jax import lax
from jax.experimental import pallas as pl
from jax.experimental.pallas import tpu as pltpu

TILE_M_PREF = 128          # preferred row tile for the 2-D slab kernels
_EPS = 1e-5

_CP1 = pltpu.CompilerParams(
    dimension_semantics=("parallel",),
    vmem_limit_bytes=60 * 1024 * 1024,   # above scoped default, < v7x physical
)


# ----------------------------- Pallas kernels ------------------------------

def _matmul_kernel(x_ref, w_ref, o_ref):
    # bias-less (tm, K) @ (K, N)  -- used for the fused QKV / KV / Q projections
    o_ref[...] = jnp.dot(x_ref[...], w_ref[...],
                         preferred_element_type=jnp.float32).astype(o_ref.dtype)


def _proj_addnorm_kernel(x_ref, w_ref, res_ref, g_ref, b_ref, o_ref, *, eps):
    # LayerNorm( x @ Wo + residual ) * g + b     (dropout p=0 -> identity)
    y = jnp.dot(x_ref[...], w_ref[...], preferred_element_type=jnp.float32)
    z = y + res_ref[...]
    mu = jnp.mean(z, axis=-1, keepdims=True)
    var = jnp.mean((z - mu) ** 2, axis=-1, keepdims=True)
    zn = (z - mu) * lax.rsqrt(var + eps)
    o_ref[...] = (zn * g_ref[...] + b_ref[...]).astype(o_ref.dtype)


def _ffn_addnorm_kernel(z_ref, w1_ref, b1_ref, w2_ref, b2_ref,
                        g_ref, bt_ref, o_ref, *, eps):
    # LayerNorm( relu(z @ W1 + b1) @ W2 + b2 + z ) * g + b
    z = z_ref[...]
    h = jnp.maximum(jnp.dot(z, w1_ref[...], preferred_element_type=jnp.float32)
                    + b1_ref[...], 0.0)
    y = jnp.dot(h, w2_ref[...], preferred_element_type=jnp.float32) + b2_ref[...]
    s = y + z
    mu = jnp.mean(s, axis=-1, keepdims=True)
    var = jnp.mean((s - mu) ** 2, axis=-1, keepdims=True)
    sn = (s - mu) * lax.rsqrt(var + eps)
    o_ref[...] = (sn * g_ref[...] + bt_ref[...]).astype(o_ref.dtype)


def _attn_kernel(valid_ref, q_ref, k_ref, v_ref, o_ref, *,
                 num_heads, scale, causal):
    # One batch per grid step; all heads handled inside via static column
    # slices of the packed (T, H) tiles -> no head transposes in HBM.
    b = pl.program_id(0)
    q = q_ref[0]                       # (Tq, H)
    k = k_ref[0]                       # (Tk, H)
    v = v_ref[0]                       # (Tk, H)
    tq, hidden = q.shape
    tk = k.shape[0]
    d = hidden // num_heads

    col = lax.broadcasted_iota(jnp.int32, (tq, tk), 1)
    if causal:
        row = lax.broadcasted_iota(jnp.int32, (tq, tk), 0)
        mask = col <= row                       # dec_valid_lens = row + 1
    else:
        mask = col < valid_ref[b]               # enc_valid_lens[b] (SMEM scalar)

    outs = []
    for h in range(num_heads):                  # static unrolled loop
        sl = slice(h * d, (h + 1) * d)
        qh = q[:, sl]
        kh = k[:, sl]
        vh = v[:, sl]
        # contract on the last dims -> no explicit k.T relayout
        s = lax.dot_general(qh, kh, (((1,), (1,)), ((), ())),
                            preferred_element_type=jnp.float32) * scale
        s = jnp.where(mask, s, -1e6)            # masked_softmax fill value
        m = jnp.max(s, axis=-1, keepdims=True)
        p = jnp.exp(s - m)
        attn = p / jnp.sum(p, axis=-1, keepdims=True)
        outs.append(jnp.dot(attn, vh, preferred_element_type=jnp.float32))
    # single lane-dense store = transpose_output's concat for free
    o_ref[0] = jnp.concatenate(outs, axis=-1).astype(o_ref.dtype)


# ----------------------------- Pallas wrappers ------------------------------

def _row_tiling(m):
    """Largest row tile <= TILE_M_PREF that is a multiple of 8; padded extent."""
    tm = min(TILE_M_PREF, ((m + 7) // 8) * 8)
    mp = ((m + tm - 1) // tm) * tm
    return tm, mp


def _pad_rows(x2d, mp):
    m = x2d.shape[0]
    if mp == m:
        return x2d
    return jnp.pad(x2d, ((0, mp - m), (0, 0)))


def matmul(x2d, w):
    """bias-less x2d @ w with row tiling (weights resident per grid step)."""
    m, k = x2d.shape
    n = w.shape[1]
    tm, mp = _row_tiling(m)
    out = pl.pallas_call(
        _matmul_kernel,
        out_shape=jax.ShapeDtypeStruct((mp, n), jnp.float32),
        grid=(mp // tm,),
        in_specs=[pl.BlockSpec((tm, k), lambda i: (i, 0)),
                  pl.BlockSpec((k, n), lambda i: (0, 0))],
        out_specs=pl.BlockSpec((tm, n), lambda i: (i, 0)),
        compiler_params=_CP1,
    )(_pad_rows(x2d, mp), w)
    return out[:m] if mp != m else out


def proj_addnorm(x2d, wo, res2d, gamma, beta, eps=_EPS):
    """LayerNorm(x2d @ wo + res2d) * gamma + beta   (Wo proj fused w/ AddNorm)."""
    m, h = x2d.shape
    tm, mp = _row_tiling(m)
    kernel = functools.partial(_proj_addnorm_kernel, eps=eps)
    out = pl.pallas_call(
        kernel,
        out_shape=jax.ShapeDtypeStruct((mp, h), jnp.float32),
        grid=(mp // tm,),
        in_specs=[pl.BlockSpec((tm, h), lambda i: (i, 0)),
                  pl.BlockSpec((h, h), lambda i: (0, 0)),
                  pl.BlockSpec((tm, h), lambda i: (i, 0)),
                  pl.BlockSpec((1, h), lambda i: (0, 0)),
                  pl.BlockSpec((1, h), lambda i: (0, 0))],
        out_specs=pl.BlockSpec((tm, h), lambda i: (i, 0)),
        compiler_params=_CP1,
    )(_pad_rows(x2d, mp), wo, _pad_rows(res2d, mp), gamma, beta)
    return out[:m] if mp != m else out


def ffn_addnorm(z2d, w1, b1, w2, b2, gamma, beta, eps=_EPS):
    """LayerNorm(relu(z @ W1 + b1) @ W2 + b2 + z) * gamma + beta (fused FFN)."""
    m, h = z2d.shape
    f = w1.shape[1]
    tm, mp = _row_tiling(m)
    kernel = functools.partial(_ffn_addnorm_kernel, eps=eps)
    out = pl.pallas_call(
        kernel,
        out_shape=jax.ShapeDtypeStruct((mp, h), jnp.float32),
        grid=(mp // tm,),
        in_specs=[pl.BlockSpec((tm, h), lambda i: (i, 0)),
                  pl.BlockSpec((h, f), lambda i: (0, 0)),
                  pl.BlockSpec((1, f), lambda i: (0, 0)),
                  pl.BlockSpec((f, h), lambda i: (0, 0)),
                  pl.BlockSpec((1, h), lambda i: (0, 0)),
                  pl.BlockSpec((1, h), lambda i: (0, 0)),
                  pl.BlockSpec((1, h), lambda i: (0, 0))],
        out_specs=pl.BlockSpec((tm, h), lambda i: (i, 0)),
        compiler_params=_CP1,
    )(_pad_rows(z2d, mp), w1, b1, w2, b2, gamma, beta)
    return out[:m] if mp != m else out


def attention(q, k, v, valid_lens, num_heads, *, causal):
    """q,k,v: (B, T, H) packed heads; valid_lens: (B,) int32 (ignored if causal)."""
    b, tq, h = q.shape
    tk = k.shape[1]
    d = h // num_heads
    kernel = functools.partial(_attn_kernel, num_heads=num_heads,
                               scale=1.0 / math.sqrt(d), causal=causal)
    return pl.pallas_call(
        kernel,
        out_shape=jax.ShapeDtypeStruct((b, tq, h), jnp.float32),
        grid_spec=pltpu.PrefetchScalarGridSpec(
            num_scalar_prefetch=1,
            grid=(b,),
            in_specs=[pl.BlockSpec((1, tq, h), lambda i, vl: (i, 0, 0)),
                      pl.BlockSpec((1, tk, h), lambda i, vl: (i, 0, 0)),
                      pl.BlockSpec((1, tk, h), lambda i, vl: (i, 0, 0))],
            out_specs=pl.BlockSpec((1, tq, h), lambda i, vl: (i, 0, 0))),
        compiler_params=_CP1,
    )(valid_lens.astype(jnp.int32), q, k, v)


# ----------------------------- decoder block --------------------------------

def decoder_block(X, enc_outputs, enc_valid_lens, params, num_heads):
    """Forward of DecoderBlock in training mode with state[2][i] = None."""
    B, T, H = X.shape
    Tk = enc_outputs.shape[1]
    M = B * T
    X2d = X.reshape(M, H)

    # --- self attention (causal) + addnorm1, Wo fused with the LayerNorm ---
    p1 = params["attn1"]
    w_qkv = jnp.concatenate([p1["Wq"], p1["Wk"], p1["Wv"]], axis=1)  # (H, 3H)
    qkv = matmul(X2d, w_qkv).reshape(B, T, 3 * H)
    q1, k1, v1 = qkv[..., :H], qkv[..., H:2 * H], qkv[..., 2 * H:]
    a1 = attention(q1, k1, v1, jnp.zeros((B,), jnp.int32), num_heads,
                   causal=True)
    Y2d = proj_addnorm(a1.reshape(M, H), p1["Wo"], X2d,
                       params["ln1"]["g"], params["ln1"]["b"])

    # --- cross attention (enc_valid_lens mask) + addnorm2 ---
    p2 = params["attn2"]
    q2 = matmul(Y2d, p2["Wq"]).reshape(B, T, H)
    w_kv = jnp.concatenate([p2["Wk"], p2["Wv"]], axis=1)             # (H, 2H)
    kv = matmul(enc_outputs.reshape(B * Tk, H), w_kv).reshape(B, Tk, 2 * H)
    k2, v2 = kv[..., :H], kv[..., H:]
    a2 = attention(q2, k2, v2, enc_valid_lens, num_heads, causal=False)
    Z2d = proj_addnorm(a2.reshape(M, H), p2["Wo"], Y2d,
                       params["ln2"]["g"], params["ln2"]["b"])

    # --- position-wise FFN + addnorm3 (fully fused) ---
    pf = params["ffn"]
    out2d = ffn_addnorm(Z2d, pf["W1"], pf["b1"], pf["W2"], pf["b2"],
                        params["ln3"]["g"], params["ln3"]["b"])
    return out2d.reshape(B, T, H)


# ----------------------------- pure-JAX reference ---------------------------

def _transpose_qkv(X, num_heads):
    B, T, H = X.shape
    X = X.reshape(B, T, num_heads, H // num_heads)
    X = jnp.transpose(X, (0, 2, 1, 3))
    return X.reshape(B * num_heads, T, H // num_heads)


def _transpose_output(X, num_heads):
    BH, T, d = X.shape
    B = BH // num_heads
    X = X.reshape(B, num_heads, T, d)
    X = jnp.transpose(X, (0, 2, 1, 3))
    return X.reshape(B, T, num_heads * d)


def _ref_mha(Xq, Xkv, valid_bh_tq, p, num_heads):
    q = _transpose_qkv(Xq @ p["Wq"], num_heads)
    k = _transpose_qkv(Xkv @ p["Wk"], num_heads)
    v = _transpose_qkv(Xkv @ p["Wv"], num_heads)
    d = q.shape[-1]
    scores = jnp.einsum("bqd,bkd->bqk", q, k) / math.sqrt(d)
    col = jnp.arange(scores.shape[-1])[None, None, :]
    scores = jnp.where(col < valid_bh_tq[..., None], scores, -1e6)
    attn = jax.nn.softmax(scores, axis=-1)
    out = jnp.einsum("bqk,bkd->bqd", attn, v)
    return _transpose_output(out, num_heads) @ p["Wo"]


def _ref_addnorm(X, Y, g, b, eps=_EPS):
    z = X + Y
    mu = z.mean(-1, keepdims=True)
    var = ((z - mu) ** 2).mean(-1, keepdims=True)
    return (z - mu) / jnp.sqrt(var + eps) * g + b


def _ref_block(X, enc, enc_valid, params, num_heads):
    B, T, H = X.shape
    dec_valid = jnp.tile(jnp.arange(1, T + 1, dtype=jnp.int32), (B, 1))
    dec_valid_bh = jnp.repeat(dec_valid, num_heads, axis=0)
    X2 = _ref_mha(X, X, dec_valid_bh, params["attn1"], num_heads)
    Y = _ref_addnorm(X, X2, params["ln1"]["g"], params["ln1"]["b"])
    enc_valid_bh = jnp.broadcast_to(
        jnp.repeat(enc_valid.astype(jnp.int32), num_heads)[:, None],
        (B * num_heads, T))
    Y2 = _ref_mha(Y, enc, enc_valid_bh, params["attn2"], num_heads)
    Z = _ref_addnorm(Y, Y2, params["ln2"]["g"], params["ln2"]["b"])
    p = params["ffn"]
    F = jnp.maximum(Z @ p["W1"] + p["b1"], 0.0) @ p["W2"] + p["b2"]
    return _ref_addnorm(Z, F, params["ln3"]["g"], params["ln3"]["b"])


# ------------------------------------ main -----------------------------------

if __name__ == "__main__":
    B, T, Tenc, H, NH, FFN_H = 2, 8, 8, 32, 4, 64

    key = jax.random.PRNGKey(0)
    ks = jax.random.split(key, 12)

    def wmat(k, shape):
        return jax.random.normal(k, shape, jnp.float32) * 0.1

    def attn_params(k0, k1, k2, k3):
        return {"Wq": wmat(k0, (H, H)), "Wk": wmat(k1, (H, H)),
                "Wv": wmat(k2, (H, H)), "Wo": wmat(k3, (H, H))}

    params = {
        "attn1": attn_params(ks[0], ks[1], ks[2], ks[3]),
        "attn2": attn_params(ks[4], ks[5], ks[6], ks[7]),
        "ffn": {"W1": wmat(ks[8], (H, FFN_H)),
                "b1": jnp.zeros((1, FFN_H), jnp.float32),
                "W2": wmat(ks[9], (FFN_H, H)),
                "b2": jnp.zeros((1, H), jnp.float32)},
        "ln1": {"g": jnp.ones((1, H), jnp.float32),
                "b": jnp.zeros((1, H), jnp.float32)},
        "ln2": {"g": jnp.ones((1, H), jnp.float32),
                "b": jnp.zeros((1, H), jnp.float32)},
        "ln3": {"g": jnp.ones((1, H), jnp.float32),
                "b": jnp.zeros((1, H), jnp.float32)},
    }

    kx, ke = jax.random.split(ks[10])
    X = jax.random.normal(kx, (B, T, H), jnp.float32)
    enc_outputs = jax.random.normal(ke, (B, Tenc, H), jnp.float32)
    enc_valid_lens = jnp.array([5, 8], dtype=jnp.int32)

    out = decoder_block(X, enc_outputs, enc_valid_lens, params, NH)
    out = jax.block_until_ready(out)

    ref = _ref_block(X, enc_outputs, enc_valid_lens, params, NH)
    assert out.shape == (B, T, H)
    assert jnp.allclose(out, ref, atol=2e-4, rtol=2e-4), (
        float(jnp.max(jnp.abs(out - ref))))

    print("KERNEL_OK")
</pallas_src>

<mosaic_0001>
module attributes {stable_mosaic.version = 11 : i64} {
  func.func @_matmul_kernel(%arg0: i32, %arg1: memref<16x32xf32, #tpu.memory_space<vmem>>, %arg2: memref<32x96xf32, #tpu.memory_space<vmem>>, %arg3: memref<16x96xf32, #tpu.memory_space<vmem>>) attributes {dimension_semantics = [#tpu.dimension_semantics<parallel>], iteration_bounds = array<i64: 1>, scalar_prefetch = 0 : i64, scratch_operands = 0 : i64, tpu.core_type = #tpu.core_type<tc>, window_params = [{transform_indices = @transform_0, window_bounds = array<i64: 16, 32>}, {pipeline_mode = #tpu.pipeline_mode<synchronous>, transform_indices = @transform_1, window_bounds = array<i64: 32, 96>}, {transform_indices = @transform_2, window_bounds = array<i64: 16, 96>}]} {
    %c0 = arith.constant 0 : index
    %c0_0 = arith.constant 0 : index
    %0 = vector.load %arg1[%c0, %c0_0] : memref<16x32xf32, #tpu.memory_space<vmem>>, vector<16x32xf32>
    %c0_1 = arith.constant 0 : index
    %c0_2 = arith.constant 0 : index
    %1 = vector.load %arg2[%c0_1, %c0_2] : memref<32x96xf32, #tpu.memory_space<vmem>>, vector<32x96xf32>
    %cst = arith.constant dense<0.000000e+00> : vector<16x96xf32>
    %2 = tpu.matmul %0, %1, %cst {dimension_numbers = #tpu.dot_dimension_numbers<[1], [0], [0], [1], [0, 0, 1, 1], [], []>} : vector<16x32xf32>, vector<32x96xf32>, vector<16x96xf32> -> vector<16x96xf32>
    %c0_3 = arith.constant 0 : index
    %c0_4 = arith.constant 0 : index
    %3 = vector.load %arg3[%c0_3, %c0_4] : memref<16x96xf32, #tpu.memory_space<vmem>>, vector<16x96xf32>
    tpu.vector_store %arg3[%c0_3, %c0_4], %2 {strides = array<i32>} : memref<16x96xf32, #tpu.memory_space<vmem>>, vector<16x96xf32>,
    return
  }
  func.func @transform_0(%arg0: i32) -> (i32, i32) {
    %c0_i32 = arith.constant 0 : i32
    %c0_i32_0 = arith.constant 0 : i32
    return %arg0, %c0_i32 : i32, i32
  }
  func.func @transform_1(%arg0: i32) -> (i32, i32) {
    %c0_i32 = arith.constant 0 : i32
    %c0_i32_0 = arith.constant 0 : i32
    %c0_i32_1 = arith.constant 0 : i32
    return %c0_i32, %c0_i32_0 : i32, i32
  }
  func.func @transform_2(%arg0: i32) -> (i32, i32) {
    %c0_i32 = arith.constant 0 : i32
    %c0_i32_0 = arith.constant 0 : i32
    return %arg0, %c0_i32 : i32, i32
  }
}

</mosaic_0001>

<llo_original>
// kernel: tpu_custom_call.1
$region0: #{tpu_custom_call.1}
  #allocation0 [shape = 'u32[]', space=smem, size = 0x4, offset = 0x4, fixed_abs, tag = 'smem constant byte address 0x4 - core index']
  #allocation1 [shape = 'u32[144,128]{1,0:T(1,128)}', space=vmem, size = 0x12000, scoped, tag = 'internal scratch']
  %s0 = inlined_call_operand.hbm [shape: f32[16,32], index: 0, kind: input, shape index: {}]
  %s1 = inlined_call_operand.hbm [shape: f32[32,96], index: 1, kind: input, shape index: {}]
  %s2 = inlined_call_operand.hbm [shape: f32[16,96], index: 2, kind: output, shape index: {}]
  %s3 = sld [smem:[#allocation0]]
  $region26: #{tpu_custom_call.1} parent=0
    _
  %s5 = ssub.s32 1, %s3
  %s6 = scalar_select 0, %s5, %s3
  $region1: #{tpu_custom_call.1} parent=0
    #allocation2 [shape = 'u8[8192]{0}', space=vmem, size = 0x2000, scoped, tag = 'input window, operand 0, single buffered']
    #allocation3 [shape = 's32[1]{0}', space=sflag, size = 0x4, scoped, tag = 'scoped memory for tpu_custom_call.1']
    #allocation4 [shape = 's32[1]{0}', space=sflag, size = 0x4, scoped, tag = 'scoped memory for tpu_custom_call.1']
    #allocation5 [shape = 'u8[16384]{0}', space=vmem, size = 0x4000, scoped, tag = 'input window, operand 1, single buffered']
    #allocation6 [shape = 's32[1]{0}', space=sflag, size = 0x4, scoped, tag = 'scoped memory for tpu_custom_call.1']
    #allocation7 [shape = 'u8[8192]{0}', space=vmem, size = 0x2000, scoped, tag = 'output window, operand 0, single buffered']
    %7 = vsyncpa [#allocation3], 0
    %8 = vsyncpa [#allocation6], 0
    %9 = vsyncpa [#allocation4], 0
    // Predicated region
    $region2: #{tpu_custom_call.1} parent=1 // pred_check
      _
    $region3: #{tpu_custom_call.1} parent=1 // pred_check_branch
      %11 = sbr.rel (0) target = $region5
    $region4: #{tpu_custom_call.1} parent=1 // pred_region
      %s13 = ssub.s32 256, 256
      %14 = vsyncadd [#allocation3], %s13
      %s15 = sshll.u32 [#allocation2], 4
      %s16 = int_to_ptr.vmem [resolvable:$true] %s15
      %21 = dma.hbm_to_vmem [thread:$0]  %s0, 256, %s16, [#allocation3], 128, 128, 8
    $region5: #{tpu_custom_call.1} parent=1 // pred_fallthru
      _
    // Predicated region
    $region6: #{tpu_custom_call.1} parent=1 // pred_check
      _
    $region7: #{tpu_custom_call.1} parent=1 // pred_check_branch
      %23 = sbr.rel (0) target = $region9
    $region8: #{tpu_custom_call.1} parent=1 // pred_region
      %s25 = ssub.s32 512, 512
      %26 = vsyncadd [#allocation6], %s25
      %s27 = sshll.u32 [#allocation5], 4
      %s28 = int_to_ptr.vmem [resolvable:$true] %s27
      %33 = dma.hbm_to_vmem [thread:$0]  %s1, 512, %s28, [#allocation6], 128, 128, 8
    $region9: #{tpu_custom_call.1} parent=1 // pred_fallthru
      _
    // Predicated region
    $region10: #{tpu_custom_call.1} parent=1 // pred_check
      _
    $region11: #{tpu_custom_call.1} parent=1 // pred_check_branch
      %35 = sbr.rel (0) target = $region13
    $region12: #{tpu_custom_call.1} parent=1 // pred_region
      %36 = dma.done [#allocation3], 256
    $region13: #{tpu_custom_call.1} parent=1 // pred_fallthru
      _
    // Predicated region
    $region14: #{tpu_custom_call.1} parent=1 // pred_check
      _
    $region15: #{tpu_custom_call.1} parent=1 // pred_check_branch
      %38 = sbr.rel (0) target = $region17
    $region16: #{tpu_custom_call.1} parent=1 // pred_region
      %39 = dma.done [#allocation6], 512
    $region17: #{tpu_custom_call.1} parent=1 // pred_fallthru
      _
    %v40 = vld [vmem:[#allocation2] sm:$0xff]
    %v41 = vld [vmem:[#allocation2 + $0x8] sm:$0xff]
    %v42 = vld [vmem:[#allocation5] sm:$0xff]
    %v43 = vld [vmem:[#allocation5 + $0x8] sm:$0xff]
    %v44 = vld [vmem:[#allocation5 + $0x10] sm:$0xff]
    %v45 = vld [vmem:[#allocation5 + $0x18] sm:$0xff]
    %vm46 = vcmask 261120
    %v48 = vsel %vm46, %v40, 0
    %v51 = vsel %vm46, %v41, 0
    %53 = vmatprep.subr.mxu0 0.0
    %54 = vmatpush1.msra.mxu0 0.0
    %55 = vmatprep.subr.mxu0 0.0
    %56 = vmatpush1.msra.mxu0 0.0
    %57 = vmatprep.subr.mxu0 0.0
    %58 = vmatpush1.msra.mxu0 0.0
    %59 = vmatprep.subr.mxu0 0.0
    %60 = vmatpush1.msra.mxu0 0.0
    %61 = vmatprep.subr.mxu0 0.0
    %62 = vmatpush1.msra.mxu0 0.0
    %63 = vmatprep.subr.mxu0 0.0
    %64 = vmatpush1.msra.mxu0 0.0
    %65 = vmatprep.subr.mxu0 0.0
    %66 = vmatpush1.msra.mxu0 0.0
    %67 = vmatprep.subr.mxu0 0.0
    %68 = vmatpush1.msra.mxu0 0.0
    %69 = vmatprep.subr.mxu0 0.0
    %70 = vmatpush1.msra.mxu0 0.0
    %71 = vmatprep.subr.mxu0 0.0
    %72 = vmatpush1.msra.mxu0 0.0
    %73 = vmatprep.subr.mxu0 0.0
    %74 = vmatpush1.msra.mxu0 0.0
    %75 = vmatprep.subr.mxu0 0.0
    %76 = vmatpush1.msra.mxu0 0.0
    %77 = vmatprep.subr.mxu0 0.0
    %78 = vmatpush1.msra.mxu0 %v45
    %79 = vmatprep.subr.mxu0 0.0
    %80 = vmatpush1.msra.mxu0 %v44
    %81 = vmatprep.subr.mxu0 0.0
    %82 = vmatpush1.msra.mxu0 %v43
    %83 = vmatprep.subr.mxu0 0.0
    %84 = vmatpush1.msra.mxu0 %v42
    %85 = vmatprep.subr.mxu0 0.0
    %86 = vmatpush2.msra.mxu0 0.0
    %87 = vmatprep.subr.mxu0 0.0
    %88 = vmatpush2.msra.mxu0 0.0
    %89 = vmatprep.subr.mxu0 0.0
    %90 = vmatpush2.msra.mxu0 0.0
    %91 = vmatprep.subr.mxu0 0.0
    %92 = vmatpush2.msra.mxu0 0.0
    %93 = vmatprep.subr.mxu0 0.0
    %94 = vmatpush2.msra.mxu0 0.0
    %95 = vmatprep.subr.mxu0 0.0
    %96 = vmatpush2.msra.mxu0 0.0
    %97 = vmatprep.subr.mxu0 0.0
    %98 = vmatpush2.msra.mxu0 0.0
    %99 = vmatprep.subr.mxu0 0.0
    %100 = vmatpush2.msra.mxu0 0.0
    %101 = vmatprep.subr.mxu0 0.0
    %102 = vmatpush2.msra.mxu0 0.0
    %103 = vmatprep.subr.mxu0 0.0
    %104 = vmatpush2.msra.mxu0 0.0
    %105 = vmatprep.subr.mxu0 0.0
    %106 = vmatpush2.msra.mxu0 0.0
    %107 = vmatprep.subr.mxu0 0.0
    %108 = vmatpush2.msra.mxu0 0.0
    %109 = vmatprep.subr.mxu0 0.0
    %110 = vmatpush2.msra.mxu0 0.0
    %111 = vmatprep.subr.mxu0 0.0
    %112 = vmatpush2.msra.mxu0 0.0
    %113 = vmatprep.subr.mxu0 0.0
    %114 = vmatpush2.msra.mxu0 0.0
    %115 = vmatprep.subr.mxu0 0.0
    %116 = vmatpush2.msra.mxu0 0.0
    %117 = vmatprep.mubr.f32.mxu0 0.0
    %118 = vmatmul.mubr.f32.gmra.mxu0 %v48
    %v119 = vpop.f32.mrf.mxu0
    %v120 = vadd.f32 0.0, %v119
    %v121 = vpop.f32.mrf.mxu0
    %122 = vmatprep.mubr.f32.mxu0 0.0
    %123 = vmatmul.mubr.f32.gmra.mxu0 %v51
    %v124 = vpop.f32.mrf.mxu0
    %v125 = vadd.f32 0.0, %v124
    %v126 = vpop.f32.mrf.mxu0
    %127 = vdwg.mxu0
    %vm128 = vcmask 785408
    %129 = vst.msk [vmem:[#allocation7] sm:$0xff] %vm128, %v120
    %130 = vst.msk [vmem:[#allocation7 + $0x8] sm:$0xff] %vm128, %v125
    // Predicated region
    $region18: #{tpu_custom_call.1} parent=1 // pred_check
      _
    $region19: #{tpu_custom_call.1} parent=1 // pred_check_branch
      %132 = sbr.rel (0) target = $region21
    $region20: #{tpu_custom_call.1} parent=1 // pred_region
      %s134 = ssub.s32 256, 256
      %135 = vsyncadd [#allocation4], %s134
      %s136 = sshll.u32 [#allocation7], 4
      %s137 = int_to_ptr.vmem [resolvable:$true] %s136
      %142 = dma.vmem_to_hbm [thread:$0]  %s137, 256, %s2, [#allocation4], 128, 128, 8
    $region21: #{tpu_custom_call.1} parent=1 // pred_fallthru
      _
    // Predicated region
    $region22: #{tpu_custom_call.1} parent=1 // pred_check
      _
    $region23: #{tpu_custom_call.1} parent=1 // pred_check_branch
      %144 = sbr.rel (0) target = $region25
    $region24: #{tpu_custom_call.1} parent=1 // pred_region
      %145 = dma.done [#allocation4], 256
    $region25: #{tpu_custom_call.1} parent=1 // pred_fallthru
      _
    %146 = vsyncpa [#allocation3], 1
    %147 = vsyncpa [#allocation6], 1
    %148 = vsyncpa [#allocation4], 1

</llo_original>
